<compile_context>
chip_gen: v7x
topology: tpu7x:2x2x1
jax: 0.10.0
libtpu: 0.0.40
codegen_flags: <defaults>
</compile_context>

<pallas_src>
import functools

import jax
import jax.numpy as jnp
from jax import lax
from jax.experimental import pallas as pl
from jax.experimental.pallas import tpu as pltpu

_LANE = 128
_VPU_MAX_CHANNELS = 16          # use lane-dense VPU kernel when Cin, Cout <= this
_VMEM_BUDGET_BYTES = 12 * 1024 * 1024   # single-buffer working-set budget (x2 for double buffering)
_VMEM_LIMIT_BYTES = 48 * 1024 * 1024


def _round_up(n, m):
    return ((n + m - 1) // m) * m


# ---------------------------------------------------------------------------
# Kernel 1: lane-dense VPU formulation (small channel counts).
#   xr/xi : (B, Cin, Mpad)     wr/wi : (Cin, Cout, Mpad)     out : (B, Cout, Mpad)
# Modes sit in the lane dim (Mpad multiple of 128) -> all loads/stores unmasked
# and every vreg fully occupied.  Cin is small & static -> unrolled MACs.
# ---------------------------------------------------------------------------
def _vpu_spectral_kernel(xr_ref, xi_ref, wr_ref, wi_ref, or_ref, oi_ref):
    B, Cin, Mpad = xr_ref.shape
    Cout = wr_ref.shape[1]
    xr = xr_ref[...]
    xi = xi_ref[...]
    wr = wr_ref[...]
    wi = wi_ref[...]
    acc_r = jnp.zeros((B, Cout, Mpad), jnp.float32)
    acc_i = jnp.zeros((B, Cout, Mpad), jnp.float32)
    for i in range(Cin):                      # static, small -> fully unrolled
        xr_i = xr[:, i:i + 1, :]              # (B, 1, Mpad)
        xi_i = xi[:, i:i + 1, :]
        wr_i = wr[i:i + 1, :, :]              # (1, Cout, Mpad)
        wi_i = wi[i:i + 1, :, :]
        # (a + ib)(c + id) = (ac - bd) + i(ad + bc)
        acc_r = acc_r + xr_i * wr_i - xi_i * wi_i
        acc_i = acc_i + xr_i * wi_i + xi_i * wr_i
    or_ref[...] = acc_r
    oi_ref[...] = acc_i


# ---------------------------------------------------------------------------
# Kernel 2: fused complex matmul on the MXU (larger channel counts).
#   x : (TM, B, 2Cin)   w : (TM, 2Cin, 2Cout)   out : (TM, B, 2Cout)
# One batched matmul per mode-block replaces 4 real matmuls per single mode.
# ---------------------------------------------------------------------------
def _fused_mode_matmul_kernel(x_ref, w_ref, o_ref):
    o_ref[...] = lax.dot_general(
        x_ref[...], w_ref[...],
        dimension_numbers=(((2,), (1,)), ((0,), (0,))),
        preferred_element_type=jnp.float32)
    # NOTE: on v6e/v7x, casting operands to bf16 (keeping f32 accumulation) would
    # roughly 3x MXU throughput for large Cin/Cout, at some accuracy cost.


# ---------------------------------------------------------------------------
# One-time weight preparation (hoisted out of the per-forward path).
# ---------------------------------------------------------------------------
def prepare_spectral_weights(weights1, weights2, max_vpu_channels=_VPU_MAX_CHANNELS):
    """Precompute the kernel-layout weights once (at layer init).

    Returns a tuple of arrays whose structure selects the kernel path:
      * (wr, wi)   each (Cin, Cout, Mpad)   -> VPU, modes-in-lanes path
      * (w_fused,) shape (M, 2Cin, 2Cout)   -> fused-complex MXU matmul path
    where M = 2*modes1*modes2 (both frequency corners stacked) and Mpad rounds
    M up to a multiple of 128 lanes.
    """
    Cin, Cout, m1, m2 = weights1.shape
    M = 2 * m1 * m2
    if Cin <= max_vpu_channels and Cout <= max_vpu_channels:
        def to_com(w):  # (Cin, Cout, m1, m2) -> (Cin, Cout, m1*m2)
            return w.reshape(Cin, Cout, m1 * m2)
        wm = jnp.concatenate([to_com(weights1), to_com(weights2)], axis=-1)  # (Cin, Cout, M)
        Mpad = _round_up(M, _LANE)
        pad = ((0, 0), (0, 0), (0, Mpad - M))
        wr = jnp.pad(jnp.real(wm).astype(jnp.float32), pad)
        wi = jnp.pad(jnp.imag(wm).astype(jnp.float32), pad)
        return (wr, wi)
    else:
        def to_mic(w):  # (Cin, Cout, m1, m2) -> (m1*m2, Cin, Cout)
            return jnp.transpose(w, (2, 3, 0, 1)).reshape(m1 * m2, Cin, Cout)
        wm = jnp.concatenate([to_mic(weights1), to_mic(weights2)], axis=0)   # (M, Cin, Cout)
        wr = jnp.real(wm).astype(jnp.float32)
        wi = jnp.imag(wm).astype(jnp.float32)
        # Real-block form of the complex product: [xr | xi] @ [[wr, wi], [-wi, wr]]
        w_fused = jnp.concatenate(
            [jnp.concatenate([wr, wi], axis=-1),
             jnp.concatenate([-wi, wr], axis=-1)], axis=1)                   # (M, 2Cin, 2Cout)
        return (w_fused,)


# ---------------------------------------------------------------------------
# Forward paths.
# ---------------------------------------------------------------------------
def _forward_vpu(x, wr, wi, modes1, modes2):
    B, Cin, H, W = x.shape
    Cout = wr.shape[1]
    Mpad = wr.shape[2]
    M = 2 * modes1 * modes2
    Wf = W // 2 + 1
    if Mpad != _round_up(M, _LANE) or wr.shape[0] != Cin:
        raise ValueError("prepared weights do not match (modes1, modes2, Cin)")

    # TODO(synk): rfft2/irfft2 have no Pallas equivalent; they stay in plain JAX.
    x_ft = jnp.fft.rfft2(x)                                   # (B, Cin, H, Wf) complex64
    x_top = x_ft[:, :, :modes1, :modes2].reshape(B, Cin, modes1 * modes2)
    x_bot = x_ft[:, :, H - modes1:, :modes2].reshape(B, Cin, modes1 * modes2)
    xm = jnp.concatenate([x_top, x_bot], axis=-1)             # (B, Cin, M)
    pad = ((0, 0), (0, 0), (0, Mpad - M))
    xr = jnp.pad(jnp.real(xm).astype(jnp.float32), pad)
    xi = jnp.pad(jnp.imag(xm).astype(jnp.float32), pad)

    cost = pl.CostEstimate(
        flops=8 * B * Cin * Cout * Mpad,
        transcendentals=0,
        bytes_accessed=4 * (2 * B * Cin * Mpad + 2 * Cin * Cout * Mpad
                            + 2 * B * Cout * Mpad))

    out_r, out_i = pl.pallas_call(
        _vpu_spectral_kernel,
        out_shape=(jax.ShapeDtypeStruct((B, Cout, Mpad), jnp.float32),
                   jax.ShapeDtypeStruct((B, Cout, Mpad), jnp.float32)),
        grid=(1,),
        in_specs=[
            pl.BlockSpec((B, Cin, Mpad), lambda i: (0, 0, 0)),
            pl.BlockSpec((B, Cin, Mpad), lambda i: (0, 0, 0)),
            pl.BlockSpec((Cin, Cout, Mpad), lambda i: (0, 0, 0)),
            pl.BlockSpec((Cin, Cout, Mpad), lambda i: (0, 0, 0)),
        ],
        out_specs=(
            pl.BlockSpec((B, Cout, Mpad), lambda i: (0, 0, 0)),
            pl.BlockSpec((B, Cout, Mpad), lambda i: (0, 0, 0)),
        ),
        compiler_params=pltpu.CompilerParams(
            dimension_semantics=("arbitrary",)),
        cost_estimate=cost,
    )(xr, xi, wr, wi)

    out_m = (out_r[..., :M] + 1j * out_i[..., :M]).astype(jnp.complex64)   # (B, Cout, M)
    Mh = modes1 * modes2
    top = out_m[..., :Mh].reshape(B, Cout, modes1, modes2)
    bot = out_m[..., Mh:].reshape(B, Cout, modes1, modes2)

    out_ft = jnp.zeros((B, Cout, H, Wf), dtype=jnp.complex64)
    out_ft = out_ft.at[:, :, :modes1, :modes2].set(top)
    out_ft = out_ft.at[:, :, H - modes1:, :modes2].set(bot)
    return jnp.fft.irfft2(out_ft, s=(H, W))


def _forward_mxu(x, w_fused, modes1, modes2):
    B, Cin, H, W = x.shape
    M, C2in, C2out = w_fused.shape
    Cout = C2out // 2
    Wf = W // 2 + 1
    if M != 2 * modes1 * modes2 or C2in != 2 * Cin:
        raise ValueError("prepared weights do not match (modes1, modes2, Cin)")

    # TODO(synk): rfft2/irfft2 have no Pallas equivalent; they stay in plain JAX.
    x_ft = jnp.fft.rfft2(x)                                   # (B, Cin, H, Wf)

    def to_mbc(z):  # (B, Cin, m1, m2) -> (m1*m2, B, Cin)
        return jnp.transpose(z, (2, 3, 0, 1)).reshape(modes1 * modes2, B, Cin)

    x_top = x_ft[:, :, :modes1, :modes2]
    x_bot = x_ft[:, :, H - modes1:, :modes2]
    xm = jnp.concatenate([to_mbc(x_top), to_mbc(x_bot)], axis=0)            # (M, B, Cin)
    x_stk = jnp.concatenate(
        [jnp.real(xm), jnp.imag(xm)], axis=-1).astype(jnp.float32)          # (M, B, 2Cin)

    # Mode-block size: largest TM whose double-buffered working set fits the budget.
    per_mode_bytes = 4 * (B * C2in + C2in * C2out + B * C2out)
    tm = int(max(1, min(M, _VMEM_BUDGET_BYTES // (2 * per_mode_bytes))))
    n_blocks = (M + tm - 1) // tm
    Mpad = n_blocks * tm
    if Mpad != M:       # pad modes with zeros so TM divides the grid evenly
        x_stk = jnp.pad(x_stk, ((0, Mpad - M), (0, 0), (0, 0)))
        w_fused = jnp.pad(w_fused, ((0, Mpad - M), (0, 0), (0, 0)))

    cost = pl.CostEstimate(
        flops=2 * Mpad * B * C2in * C2out,
        transcendentals=0,
        bytes_accessed=4 * (Mpad * B * C2in + Mpad * C2in * C2out
                            + Mpad * B * C2out))

    out = pl.pallas_call(
        _fused_mode_matmul_kernel,
        out_shape=jax.ShapeDtypeStruct((Mpad, B, C2out), jnp.float32),
        grid=(n_blocks,),
        in_specs=[
            pl.BlockSpec((tm, B, C2in), lambda m: (m, 0, 0)),
            pl.BlockSpec((tm, C2in, C2out), lambda m: (m, 0, 0)),
        ],
        out_specs=pl.BlockSpec((tm, B, C2out), lambda m: (m, 0, 0)),
        compiler_params=pltpu.CompilerParams(
            dimension_semantics=("parallel",),
            vmem_limit_bytes=_VMEM_LIMIT_BYTES),
        cost_estimate=cost,
    )(x_stk, w_fused)

    out = out[:M]
    out_c = (out[..., :Cout] + 1j * out[..., Cout:]).astype(jnp.complex64)  # (M, B, Cout)

    def from_mbo(z):  # (m1*m2, B, Cout) -> (B, Cout, m1, m2)
        return jnp.transpose(z.reshape(modes1, modes2, B, Cout), (2, 3, 0, 1))

    Mh = modes1 * modes2
    top = from_mbo(out_c[:Mh])
    bot = from_mbo(out_c[Mh:])

    out_ft = jnp.zeros((B, Cout, H, Wf), dtype=jnp.complex64)
    out_ft = out_ft.at[:, :, :modes1, :modes2].set(top)
    out_ft = out_ft.at[:, :, H - modes1:, :modes2].set(bot)
    return jnp.fft.irfft2(out_ft, s=(H, W))


@functools.partial(jax.jit, static_argnames=("modes1", "modes2"))
def spectral_conv2d(x, w_prepared, *, modes1, modes2):
    """Forward pass matching PyTorch SpectralConv2d.

    x          : (B, Cin, H, W) float32 (NCHW)
    w_prepared : output of prepare_spectral_weights(weights1, weights2)
    returns    : (B, Cout, H, W) float32
    """
    B, Cin, H, W = x.shape
    if 2 * modes1 > H or modes2 > W // 2 + 1:
        raise ValueError(
            "retained mode counts exceed the spectrum: need 2*modes1 <= H and "
            "modes2 <= W//2+1")
    if len(w_prepared) == 2:
        return _forward_vpu(x, w_prepared[0], w_prepared[1], modes1, modes2)
    return _forward_mxu(x, w_prepared[0], modes1, modes2)


def _reference(x, w1, w2, modes1, modes2):
    """Pure-JAX reference identical to the PyTorch forward (f32-accurate einsum)."""
    B, Cin, H, W = x.shape
    Cout = w1.shape[1]
    x_ft = jnp.fft.rfft2(x)
    mul = lambda a, w: jnp.einsum('bixy,ioxy->boxy', a, w,
                                  precision=lax.Precision.HIGHEST)
    out_ft = jnp.zeros((B, Cout, H, W // 2 + 1), dtype=jnp.complex64)
    out_ft = out_ft.at[:, :, :modes1, :modes2].set(mul(x_ft[:, :, :modes1, :modes2], w1))
    out_ft = out_ft.at[:, :, H - modes1:, :modes2].set(mul(x_ft[:, :, H - modes1:, :modes2], w2))
    return jnp.fft.irfft2(out_ft, s=(H, W))


if __name__ == "__main__":
    key = jax.random.PRNGKey(0)

    def init_weights(k, Cin, Cout, m1, m2):
        # Mirrors: scale * torch.rand(..., dtype=cfloat)
        kr1, ki1, kr2, ki2 = jax.random.split(k, 4)
        scale = 1.0 / (Cin * Cout)
        shp = (Cin, Cout, m1, m2)
        w1 = scale * (jax.random.uniform(kr1, shp, dtype=jnp.float32)
                      + 1j * jax.random.uniform(ki1, shp, dtype=jnp.float32))
        w2 = scale * (jax.random.uniform(kr2, shp, dtype=jnp.float32)
                      + 1j * jax.random.uniform(ki2, shp, dtype=jnp.float32))
        return w1.astype(jnp.complex64), w2.astype(jnp.complex64)

    m1, m2 = 6, 6

    # --- small-channel demo (lane-dense VPU path) ---------------------------
    B, Cin, Cout, H, W = 2, 4, 4, 16, 16
    kx, kw, key = jax.random.split(key, 3)
    x = jax.random.normal(kx, (B, Cin, H, W), dtype=jnp.float32)
    w1, w2 = init_weights(kw, Cin, Cout, m1, m2)
    w_prep = prepare_spectral_weights(w1, w2)          # hoisted: once per layer init
    out = jax.block_until_ready(spectral_conv2d(x, w_prep, modes1=m1, modes2=m2))
    ref = jax.block_until_ready(_reference(x, w1, w2, m1, m2))
    assert out.shape == (B, Cout, H, W)
    assert out.dtype == jnp.float32
    assert jnp.max(jnp.abs(out - ref)) < 1e-4, "VPU path mismatch vs reference"

    # --- larger-channel check (fused-complex MXU matmul path) ---------------
    B2, Cin2, Cout2 = 2, 32, 32
    kx2, kw2 = jax.random.split(key)
    x2 = jax.random.normal(kx2, (B2, Cin2, H, W), dtype=jnp.float32)
    w1b, w2b = init_weights(kw2, Cin2, Cout2, m1, m2)
    w_prep2 = prepare_spectral_weights(w1b, w2b)
    out2 = jax.block_until_ready(spectral_conv2d(x2, w_prep2, modes1=m1, modes2=m2))
    ref2 = jax.block_until_ready(_reference(x2, w1b, w2b, m1, m2))
    assert out2.shape == (B2, Cout2, H, W)
    assert jnp.max(jnp.abs(out2 - ref2)) < 1e-4, "MXU path mismatch vs reference"

    print("KERNEL_OK")
</pallas_src>

<mosaic_0001>
module attributes {stable_mosaic.version = 11 : i64} {
  func.func @_vpu_spectral_kernel(%arg0: i32, %arg1: memref<2x4x128xf32, #tpu.memory_space<vmem>>, %arg2: memref<2x4x128xf32, #tpu.memory_space<vmem>>, %arg3: memref<4x4x128xf32, #tpu.memory_space<vmem>>, %arg4: memref<4x4x128xf32, #tpu.memory_space<vmem>>, %arg5: memref<2x4x128xf32, #tpu.memory_space<vmem>>, %arg6: memref<2x4x128xf32, #tpu.memory_space<vmem>>) attributes {dimension_semantics = [#tpu.dimension_semantics<arbitrary>], iteration_bounds = array<i64: 1>, scalar_prefetch = 0 : i64, scratch_operands = 0 : i64, tpu.core_type = #tpu.core_type<tc>, window_params = [{pipeline_mode = #tpu.pipeline_mode<synchronous>, transform_indices = @transform_0, window_bounds = array<i64: 2, 4, 128>}, {pipeline_mode = #tpu.pipeline_mode<synchronous>, transform_indices = @transform_1, window_bounds = array<i64: 2, 4, 128>}, {pipeline_mode = #tpu.pipeline_mode<synchronous>, transform_indices = @transform_2, window_bounds = array<i64: 4, 4, 128>}, {pipeline_mode = #tpu.pipeline_mode<synchronous>, transform_indices = @transform_3, window_bounds = array<i64: 4, 4, 128>}, {pipeline_mode = #tpu.pipeline_mode<synchronous>, transform_indices = @transform_4, window_bounds = array<i64: 2, 4, 128>}, {pipeline_mode = #tpu.pipeline_mode<synchronous>, transform_indices = @transform_5, window_bounds = array<i64: 2, 4, 128>}]} {
    %c0 = arith.constant 0 : index
    %c0_0 = arith.constant 0 : index
    %c0_1 = arith.constant 0 : index
    %0 = vector.load %arg1[%c0, %c0_0, %c0_1] : memref<2x4x128xf32, #tpu.memory_space<vmem>>, vector<2x4x128xf32>
    %c0_2 = arith.constant 0 : index
    %c0_3 = arith.constant 0 : index
    %c0_4 = arith.constant 0 : index
    %1 = vector.load %arg2[%c0_2, %c0_3, %c0_4] : memref<2x4x128xf32, #tpu.memory_space<vmem>>, vector<2x4x128xf32>
    %c0_5 = arith.constant 0 : index
    %c0_6 = arith.constant 0 : index
    %c0_7 = arith.constant 0 : index
    %2 = vector.load %arg3[%c0_5, %c0_6, %c0_7] : memref<4x4x128xf32, #tpu.memory_space<vmem>>, vector<4x4x128xf32>
    %c0_8 = arith.constant 0 : index
    %c0_9 = arith.constant 0 : index
    %c0_10 = arith.constant 0 : index
    %3 = vector.load %arg4[%c0_8, %c0_9, %c0_10] : memref<4x4x128xf32, #tpu.memory_space<vmem>>, vector<4x4x128xf32>
    %cst = arith.constant 0.000000e+00 : f32
    %4 = vector.broadcast %cst : f32 to vector<2x4x128xf32>
    %cst_11 = arith.constant 0.000000e+00 : f32
    %5 = vector.broadcast %cst_11 : f32 to vector<2x4x128xf32>
    %6 = vector.extract_strided_slice %0 {offsets = [0, 0, 0], sizes = [2, 1, 128], strides = [1, 1, 1]} : vector<2x4x128xf32> to vector<2x1x128xf32>
    %7 = vector.extract_strided_slice %1 {offsets = [0, 0, 0], sizes = [2, 1, 128], strides = [1, 1, 1]} : vector<2x4x128xf32> to vector<2x1x128xf32>
    %8 = vector.extract_strided_slice %2 {offsets = [0, 0, 0], sizes = [1, 4, 128], strides = [1, 1, 1]} : vector<4x4x128xf32> to vector<1x4x128xf32>
    %9 = vector.extract_strided_slice %3 {offsets = [0, 0, 0], sizes = [1, 4, 128], strides = [1, 1, 1]} : vector<4x4x128xf32> to vector<1x4x128xf32>
    %10 = vector.broadcast %6 : vector<2x1x128xf32> to vector<2x4x128xf32>
    %11 = vector.broadcast %8 : vector<1x4x128xf32> to vector<2x4x128xf32>
    %12 = arith.mulf %10, %11 : vector<2x4x128xf32>
    %13 = arith.addf %4, %12 : vector<2x4x128xf32>
    %14 = vector.broadcast %7 : vector<2x1x128xf32> to vector<2x4x128xf32>
    %15 = vector.broadcast %9 : vector<1x4x128xf32> to vector<2x4x128xf32>
    %16 = arith.mulf %14, %15 : vector<2x4x128xf32>
    %17 = arith.subf %13, %16 : vector<2x4x128xf32>
    %18 = vector.broadcast %6 : vector<2x1x128xf32> to vector<2x4x128xf32>
    %19 = vector.broadcast %9 : vector<1x4x128xf32> to vector<2x4x128xf32>
    %20 = arith.mulf %18, %19 : vector<2x4x128xf32>
    %21 = arith.addf %5, %20 : vector<2x4x128xf32>
    %22 = vector.broadcast %7 : vector<2x1x128xf32> to vector<2x4x128xf32>
    %23 = vector.broadcast %8 : vector<1x4x128xf32> to vector<2x4x128xf32>
    %24 = arith.mulf %22, %23 : vector<2x4x128xf32>
    %25 = arith.addf %21, %24 : vector<2x4x128xf32>
    %26 = vector.extract_strided_slice %0 {offsets = [0, 1, 0], sizes = [2, 1, 128], strides = [1, 1, 1]} : vector<2x4x128xf32> to vector<2x1x128xf32>
    %27 = vector.extract_strided_slice %1 {offsets = [0, 1, 0], sizes = [2, 1, 128], strides = [1, 1, 1]} : vector<2x4x128xf32> to vector<2x1x128xf32>
    %28 = vector.extract_strided_slice %2 {offsets = [1, 0, 0], sizes = [1, 4, 128], strides = [1, 1, 1]} : vector<4x4x128xf32> to vector<1x4x128xf32>
    %29 = vector.extract_strided_slice %3 {offsets = [1, 0, 0], sizes = [1, 4, 128], strides = [1, 1, 1]} : vector<4x4x128xf32> to vector<1x4x128xf32>
    %30 = vector.broadcast %26 : vector<2x1x128xf32> to vector<2x4x128xf32>
    %31 = vector.broadcast %28 : vector<1x4x128xf32> to vector<2x4x128xf32>
    %32 = arith.mulf %30, %31 : vector<2x4x128xf32>
    %33 = arith.addf %17, %32 : vector<2x4x128xf32>
    %34 = vector.broadcast %27 : vector<2x1x128xf32> to vector<2x4x128xf32>
    %35 = vector.broadcast %29 : vector<1x4x128xf32> to vector<2x4x128xf32>
    %36 = arith.mulf %34, %35 : vector<2x4x128xf32>
    %37 = arith.subf %33, %36 : vector<2x4x128xf32>
    %38 = vector.broadcast %26 : vector<2x1x128xf32> to vector<2x4x128xf32>
    %39 = vector.broadcast %29 : vector<1x4x128xf32> to vector<2x4x128xf32>
    %40 = arith.mulf %38, %39 : vector<2x4x128xf32>
    %41 = arith.addf %25, %40 : vector<2x4x128xf32>
    %42 = vector.broadcast %27 : vector<2x1x128xf32> to vector<2x4x128xf32>
    %43 = vector.broadcast %28 : vector<1x4x128xf32> to vector<2x4x128xf32>
    %44 = arith.mulf %42, %43 : vector<2x4x128xf32>
    %45 = arith.addf %41, %44 : vector<2x4x128xf32>
    %46 = vector.extract_strided_slice %0 {offsets = [0, 2, 0], sizes = [2, 1, 128], strides = [1, 1, 1]} : vector<2x4x128xf32> to vector<2x1x128xf32>
    %47 = vector.extract_strided_slice %1 {offsets = [0, 2, 0], sizes = [2, 1, 128], strides = [1, 1, 1]} : vector<2x4x128xf32> to vector<2x1x128xf32>
    %48 = vector.extract_strided_slice %2 {offsets = [2, 0, 0], sizes = [1, 4, 128], strides = [1, 1, 1]} : vector<4x4x128xf32> to vector<1x4x128xf32>
    %49 = vector.extract_strided_slice %3 {offsets = [2, 0, 0], sizes = [1, 4, 128], strides = [1, 1, 1]} : vector<4x4x128xf32> to vector<1x4x128xf32>
    %50 = vector.broadcast %46 : vector<2x1x128xf32> to vector<2x4x128xf32>
    %51 = vector.broadcast %48 : vector<1x4x128xf32> to vector<2x4x128xf32>
    %52 = arith.mulf %50, %51 : vector<2x4x128xf32>
    %53 = arith.addf %37, %52 : vector<2x4x128xf32>
    %54 = vector.broadcast %47 : vector<2x1x128xf32> to vector<2x4x128xf32>
    %55 = vector.broadcast %49 : vector<1x4x128xf32> to vector<2x4x128xf32>
    %56 = arith.mulf %54, %55 : vector<2x4x128xf32>
    %57 = arith.subf %53, %56 : vector<2x4x128xf32>
    %58 = vector.broadcast %46 : vector<2x1x128xf32> to vector<2x4x128xf32>
    %59 = vector.broadcast %49 : vector<1x4x128xf32> to vector<2x4x128xf32>
    %60 = arith.mulf %58, %59 : vector<2x4x128xf32>
    %61 = arith.addf %45, %60 : vector<2x4x128xf32>
    %62 = vector.broadcast %47 : vector<2x1x128xf32> to vector<2x4x128xf32>
    %63 = vector.broadcast %48 : vector<1x4x128xf32> to vector<2x4x128xf32>
    %64 = arith.mulf %62, %63 : vector<2x4x128xf32>
    %65 = arith.addf %61, %64 : vector<2x4x128xf32>
    %66 = vector.extract_strided_slice %0 {offsets = [0, 3, 0], sizes = [2, 1, 128], strides = [1, 1, 1]} : vector<2x4x128xf32> to vector<2x1x128xf32>
    %67 = vector.extract_strided_slice %1 {offsets = [0, 3, 0], sizes = [2, 1, 128], strides = [1, 1, 1]} : vector<2x4x128xf32> to vector<2x1x128xf32>
    %68 = vector.extract_strided_slice %2 {offsets = [3, 0, 0], sizes = [1, 4, 128], strides = [1, 1, 1]} : vector<4x4x128xf32> to vector<1x4x128xf32>
    %69 = vector.extract_strided_slice %3 {offsets = [3, 0, 0], sizes = [1, 4, 128], strides = [1, 1, 1]} : vector<4x4x128xf32> to vector<1x4x128xf32>
    %70 = vector.broadcast %66 : vector<2x1x128xf32> to vector<2x4x128xf32>
    %71 = vector.broadcast %68 : vector<1x4x128xf32> to vector<2x4x128xf32>
    %72 = arith.mulf %70, %71 : vector<2x4x128xf32>
    %73 = arith.addf %57, %72 : vector<2x4x128xf32>
    %74 = vector.broadcast %67 : vector<2x1x128xf32> to vector<2x4x128xf32>
    %75 = vector.broadcast %69 : vector<1x4x128xf32> to vector<2x4x128xf32>
    %76 = arith.mulf %74, %75 : vector<2x4x128xf32>
    %77 = arith.subf %73, %76 : vector<2x4x128xf32>
    %78 = vector.broadcast %66 : vector<2x1x128xf32> to vector<2x4x128xf32>
    %79 = vector.broadcast %69 : vector<1x4x128xf32> to vector<2x4x128xf32>
    %80 = arith.mulf %78, %79 : vector<2x4x128xf32>
    %81 = arith.addf %65, %80 : vector<2x4x128xf32>
    %82 = vector.broadcast %67 : vector<2x1x128xf32> to vector<2x4x128xf32>
    %83 = vector.broadcast %68 : vector<1x4x128xf32> to vector<2x4x128xf32>
    %84 = arith.mulf %82, %83 : vector<2x4x128xf32>
    %85 = arith.addf %81, %84 : vector<2x4x128xf32>
    %c0_12 = arith.constant 0 : index
    %c0_13 = arith.constant 0 : index
    %c0_14 = arith.constant 0 : index
    %86 = vector.load %arg5[%c0_12, %c0_13, %c0_14] : memref<2x4x128xf32, #tpu.memory_space<vmem>>, vector<2x4x128xf32>
    tpu.vector_store %arg5[%c0_12, %c0_13, %c0_14], %77 {strides = array<i32>} : memref<2x4x128xf32, #tpu.memory_space<vmem>>, vector<2x4x128xf32>,
    %c0_15 = arith.constant 0 : index
    %c0_16 = arith.constant 0 : index
    %c0_17 = arith.constant 0 : index
    %87 = vector.load %arg6[%c0_15, %c0_16, %c0_17] : memref<2x4x128xf32, #tpu.memory_space<vmem>>, vector<2x4x128xf32>
    tpu.vector_store %arg6[%c0_15, %c0_16, %c0_17], %85 {strides = array<i32>} : memref<2x4x128xf32, #tpu.memory_space<vmem>>, vector<2x4x128xf32>,
    return
  }
  func.func @transform_0(%arg0: i32) -> (i32, i32, i32) {
    %c0_i32 = arith.constant 0 : i32
    %c0_i32_0 = arith.constant 0 : i32
    %c0_i32_1 = arith.constant 0 : i32
    %c0_i32_2 = arith.constant 0 : i32
    return %c0_i32, %c0_i32_0, %c0_i32_1 : i32, i32, i32
  }
  func.func @transform_1(%arg0: i32) -> (i32, i32, i32) {
    %c0_i32 = arith.constant 0 : i32
    %c0_i32_0 = arith.constant 0 : i32
    %c0_i32_1 = arith.constant 0 : i32
    %c0_i32_2 = arith.constant 0 : i32
    return %c0_i32, %c0_i32_0, %c0_i32_1 : i32, i32, i32
  }
  func.func @transform_2(%arg0: i32) -> (i32, i32, i32) {
    %c0_i32 = arith.constant 0 : i32
    %c0_i32_0 = arith.constant 0 : i32
    %c0_i32_1 = arith.constant 0 : i32
    %c0_i32_2 = arith.constant 0 : i32
    return %c0_i32, %c0_i32_0, %c0_i32_1 : i32, i32, i32
  }
  func.func @transform_3(%arg0: i32) -> (i32, i32, i32) {
    %c0_i32 = arith.constant 0 : i32
    %c0_i32_0 = arith.constant 0 : i32
    %c0_i32_1 = arith.constant 0 : i32
    %c0_i32_2 = arith.constant 0 : i32
    return %c0_i32, %c0_i32_0, %c0_i32_1 : i32, i32, i32
  }
  func.func @transform_4(%arg0: i32) -> (i32, i32, i32) {
    %c0_i32 = arith.constant 0 : i32
    %c0_i32_0 = arith.constant 0 : i32
    %c0_i32_1 = arith.constant 0 : i32
    %c0_i32_2 = arith.constant 0 : i32
    return %c0_i32, %c0_i32_0, %c0_i32_1 : i32, i32, i32
  }
  func.func @transform_5(%arg0: i32) -> (i32, i32, i32) {
    %c0_i32 = arith.constant 0 : i32
    %c0_i32_0 = arith.constant 0 : i32
    %c0_i32_1 = arith.constant 0 : i32
    %c0_i32_2 = arith.constant 0 : i32
    return %c0_i32, %c0_i32_0, %c0_i32_1 : i32, i32, i32
  }
}

</mosaic_0001>

<llo_original>
// kernel: spectral_conv2d.1
$region0: #{spectral_conv2d.1}
  #allocation0 [shape = 'u32[]', space=smem, size = 0x4, offset = 0x4, fixed_abs, tag = 'smem constant byte address 0x4 - core index']
  #allocation1 [shape = 'u32[144,128]{1,0:T(1,128)}', space=vmem, size = 0x12000, scoped, tag = 'internal scratch']
  %s0 = inlined_call_operand.vmem [shape: f32[2,4,128], index: 0, kind: input, shape index: {}]
  %s1 = inlined_call_operand.vmem [shape: f32[2,4,128], index: 1, kind: input, shape index: {}]
  %s2 = inlined_call_operand.vmem [shape: f32[4,4,128], index: 2, kind: input, shape index: {}]
  %s3 = inlined_call_operand.vmem [shape: f32[4,4,128], index: 3, kind: input, shape index: {}]
  %s4 = inlined_call_operand.vmem [shape: f32[2,4,128], index: 4, kind: output, shape index: {0}]
  %s5 = inlined_call_operand.vmem [shape: f32[2,4,128], index: 5, kind: output, shape index: {1}]
  %6 = xla_tuple %s4, %s5
  %s7 = sld [smem:[#allocation0]]
  $region34: #{spectral_conv2d.1} parent=0
    _
  %s9 = ssub.s32 1, %s7
  %s10 = scalar_select 0, %s9, %s7
  // Predicated region
  $region2: #{spectral_conv2d.1} parent=0 // pred_check
    _
  $region3: #{spectral_conv2d.1} parent=0 // pred_check_branch
    %12 = sbr.rel (0) target = $region5
  $region4: #{spectral_conv2d.1} parent=0 // pred_region
    _
  $region5: #{spectral_conv2d.1} parent=0 // pred_fallthru
    _
  // Predicated region
  $region6: #{spectral_conv2d.1} parent=0 // pred_check
    _
  $region7: #{spectral_conv2d.1} parent=0 // pred_check_branch
    %14 = sbr.rel (0) target = $region9
  $region8: #{spectral_conv2d.1} parent=0 // pred_region
    _
  $region9: #{spectral_conv2d.1} parent=0 // pred_fallthru
    _
  // Predicated region
  $region10: #{spectral_conv2d.1} parent=0 // pred_check
    _
  $region11: #{spectral_conv2d.1} parent=0 // pred_check_branch
    %16 = sbr.rel (0) target = $region13
  $region12: #{spectral_conv2d.1} parent=0 // pred_region
    _
  $region13: #{spectral_conv2d.1} parent=0 // pred_fallthru
    _
  // Predicated region
  $region14: #{spectral_conv2d.1} parent=0 // pred_check
    _
  $region15: #{spectral_conv2d.1} parent=0 // pred_check_branch
    %18 = sbr.rel (0) target = $region17
  $region16: #{spectral_conv2d.1} parent=0 // pred_region
    _
  $region17: #{spectral_conv2d.1} parent=0 // pred_fallthru
    _
  %v19 = vld [vmem:[%s0] sm:$0xf]
  %v20 = vld [vmem:[%s0 + $0x4] sm:$0xf]
  %v21 = vld [vmem:[%s1] sm:$0xf]
  %v22 = vld [vmem:[%s1 + $0x4] sm:$0xf]
  %v23 = vld [vmem:[%s2] sm:$0xf]
  %v24 = vld [vmem:[%s2 + $0x4] sm:$0xf]
  %v25 = vld [vmem:[%s2 + $0x8] sm:$0xf]
  %v26 = vld [vmem:[%s2 + $0xc] sm:$0xf]
  %v27 = vld [vmem:[%s3] sm:$0xf]
  %v28 = vld [vmem:[%s3 + $0x4] sm:$0xf]
  %v29 = vld [vmem:[%s3 + $0x8] sm:$0xf]
  %v30 = vld [vmem:[%s3 + $0xc] sm:$0xf]
  %v31 = vlaneseq
  %v32 = vshrl.u32 %v31, 7
  %v33 = vsub.s32 0, %v32
  %v34 = vrot.slane %v19, %v33
  %v35 = vlaneseq
  %v36 = vshrl.u32 %v35, 7
  %v37 = vsub.s32 0, %v36
  %v38 = vrot.slane %v20, %v37
  %v39 = vmul.f32 %v34, %v23
  %v40 = vmul.f32 %v38, %v23
  %v41 = vadd.f32 %v39, 0.0
  %v42 = vadd.f32 %v40, 0.0
  %v43 = vlaneseq
  %v44 = vshrl.u32 %v43, 7
  %v45 = vsub.s32 0, %v44
  %v46 = vrot.slane %v21, %v45
  %v47 = vlaneseq
  %v48 = vshrl.u32 %v47, 7
  %v49 = vsub.s32 0, %v48
  %v50 = vrot.slane %v22, %v49
  %v51 = vmul.f32 %v46, %v27
  %v52 = vmul.f32 %v50, %v27
  %v53 = vsub.f32 %v41, %v51
  %v54 = vsub.f32 %v42, %v52
  %v55 = vmul.f32 %v34, %v27
  %v56 = vmul.f32 %v38, %v27
  %v57 = vadd.f32 %v55, 0.0
  %v58 = vadd.f32 %v56, 0.0
  %v59 = vmul.f32 %v46, %v23
  %v60 = vmul.f32 %v50, %v23
  %v61 = vadd.f32 %v57, %v59
  %v62 = vadd.f32 %v58, %v60
  %v63 = vlaneseq
  %v64 = vshrl.u32 %v63, 7
  %v65 = vsub.s32 1, %v64
  %v66 = vrot.slane %v19, %v65
  %v67 = vlaneseq
  %v68 = vshrl.u32 %v67, 7
  %v69 = vsub.s32 1, %v68
  %v70 = vrot.slane %v20, %v69
  %v71 = vmul.f32 %v66, %v24
  %v72 = vmul.f32 %v70, %v24
  %v73 = vadd.f32 %v53, %v71
  %v74 = vadd.f32 %v54, %v72
  %v75 = vlaneseq
  %v76 = vshrl.u32 %v75, 7
  %v77 = vsub.s32 1, %v76
  %v78 = vrot.slane %v21, %v77
  %v79 = vlaneseq
  %v80 = vshrl.u32 %v79, 7
  %v81 = vsub.s32 1, %v80
  %v82 = vrot.slane %v22, %v81
  %v83 = vmul.f32 %v78, %v28
  %v84 = vmul.f32 %v82, %v28
  %v85 = vsub.f32 %v73, %v83
  %v86 = vsub.f32 %v74, %v84
  %v87 = vmul.f32 %v66, %v28
  %v88 = vmul.f32 %v70, %v28
  %v89 = vadd.f32 %v61, %v87
  %v90 = vadd.f32 %v62, %v88
  %v91 = vmul.f32 %v78, %v24
  %v92 = vmul.f32 %v82, %v24
  %v93 = vadd.f32 %v89, %v91
  %v94 = vadd.f32 %v90, %v92
  %v95 = vlaneseq
  %v96 = vshrl.u32 %v95, 7
  %v97 = vsub.s32 2, %v96
  %v98 = vrot.slane %v19, %v97
  %v99 = vlaneseq
  %v100 = vshrl.u32 %v99, 7
  %v101 = vsub.s32 2, %v100
  %v102 = vrot.slane %v20, %v101
  %v103 = vmul.f32 %v98, %v25
  %v104 = vmul.f32 %v102, %v25
  %v105 = vadd.f32 %v85, %v103
  %v106 = vadd.f32 %v86, %v104
  %v107 = vlaneseq
  %v108 = vshrl.u32 %v107, 7
  %v109 = vsub.s32 2, %v108
  %v110 = vrot.slane %v21, %v109
  %v111 = vlaneseq
  %v112 = vshrl.u32 %v111, 7
  %v113 = vsub.s32 2, %v112
  %v114 = vrot.slane %v22, %v113
  %v115 = vmul.f32 %v110, %v29
  %v116 = vmul.f32 %v114, %v29
  %v117 = vsub.f32 %v105, %v115
  %v118 = vsub.f32 %v106, %v116
  %v119 = vmul.f32 %v98, %v29
  %v120 = vmul.f32 %v102, %v29
  %v121 = vadd.f32 %v93, %v119
  %v122 = vadd.f32 %v94, %v120
  %v123 = vmul.f32 %v110, %v25
  %v124 = vmul.f32 %v114, %v25
  %v125 = vadd.f32 %v121, %v123
  %v126 = vadd.f32 %v122, %v124
  %v127 = vlaneseq
  %v128 = vshrl.u32 %v127, 7
  %v129 = vsub.s32 3, %v128
  %v130 = vrot.slane %v19, %v129
  %v131 = vlaneseq
  %v132 = vshrl.u32 %v131, 7
  %v133 = vsub.s32 3, %v132
  %v134 = vrot.slane %v20, %v133
  %v135 = vmul.f32 %v130, %v26
  %v136 = vmul.f32 %v134, %v26
  %v137 = vadd.f32 %v117, %v135
  %v138 = vadd.f32 %v118, %v136
  %v139 = vlaneseq
  %v140 = vshrl.u32 %v139, 7
  %v141 = vsub.s32 3, %v140
  %v142 = vrot.slane %v21, %v141
  %v143 = vlaneseq
  %v144 = vshrl.u32 %v143, 7
  %v145 = vsub.s32 3, %v144
  %v146 = vrot.slane %v22, %v145
  %v147 = vmul.f32 %v142, %v30
  %v148 = vmul.f32 %v146, %v30
  %v149 = vsub.f32 %v137, %v147
  %v150 = vsub.f32 %v138, %v148
  %v151 = vmul.f32 %v130, %v30
  %v152 = vmul.f32 %v134, %v30
  %v153 = vadd.f32 %v125, %v151
  %v154 = vadd.f32 %v126, %v152
  %v155 = vmul.f32 %v142, %v26
  %v156 = vmul.f32 %v146, %v26
  %v157 = vadd.f32 %v153, %v155
  %v158 = vadd.f32 %v154, %v156
  %159 = vst [vmem:[%s4] sm:$0xf] %v149
  %160 = vst [vmem:[%s4 + $0x4] sm:$0xf] %v150
  %161 = vst [vmem:[%s5] sm:$0xf] %v157
  %162 = vst [vmem:[%s5 + $0x4] sm:$0xf] %v158
  // Predicated region
  $region18: #{spectral_conv2d.1} parent=0 // pred_check
    _
  $region19: #{spectral_conv2d.1} parent=0 // pred_check_branch
    %164 = sbr.rel (0) target = $region21
  $region20: #{spectral_conv2d.1} parent=0 // pred_region
    _
  $region21: #{spectral_conv2d.1} parent=0 // pred_fallthru
    _
  // Predicated region
  $region22: #{spectral_conv2d.1} parent=0 // pred_check
    _
  $region23: #{spectral_conv2d.1} parent=0 // pred_check_branch
    %166 = sbr.rel (0) target = $region25
  $region24: #{spectral_conv2d.1} parent=0 // pred_region
    _
  $region25: #{spectral_conv2d.1} parent=0 // pred_fallthru
    _
  // Predicated region
  $region26: #{spectral_conv2d.1} parent=0 // pred_check
    _
  $region27: #{spectral_conv2d.1} parent=0 // pred_check_branch
    %168 = sbr.rel (0) target = $region29
  $region28: #{spectral_conv2d.1} parent=0 // pred_region
    _
  $region29: #{spectral_conv2d.1} parent=0 // pred_fallthru
    _
  // Predicated region
  $region30: #{spectral_conv2d.1} parent=0 // pred_check
    _
  $region31: #{spectral_conv2d.1} parent=0 // pred_check_branch
    %170 = sbr.rel (0) target = $region33
  $region32: #{spectral_conv2d.1} parent=0 // pred_region
    _
  $region33: #{spectral_conv2d.1} parent=0 // pred_fallthru
    _

// kernel: reverse.1
$region0: #{reverse.1}
  %s0 = inlined_call_operand.vmem [shape: f32[2,4,16,7], index: 0, kind: input, shape index: {}]
  %s1 = inlined_call_operand.vmem [shape: f32[2,4,16,7], index: 1, kind: output, shape index: {}]
  $region1: #{reverse.1} parent=0
    #allocation0 [shape = 'u8[65536]{0}', space=vmem, size = 0x10000, scoped, tag = 'operand span for operand 0']
    #allocation1 [shape = 'u8[32768]{0}', space=vmem, size = 0x8000, scoped, tag = 'operand span for operand 1']
    %s2 = scalar_lea.vmem [#allocation0], 8
    // Predicated region
    $region2: #{reverse.1} parent=1 // pred_check
      _
    $region3: #{reverse.1} parent=1 // pred_check_branch
      %4 = sbr.rel (0) target = $region5
    $region4: #{reverse.1} parent=1 // pred_region
      // Predicated region
      $region6: #{reverse.1} parent=4 // pred_check
        _
      $region7: #{reverse.1} parent=4 // pred_check_branch
        %6 = sbr.rel (0) target = $region9
      $region8: #{reverse.1} parent=4 // pred_region
        // Predicated region
        $region21: #{reverse.1} parent=8 // pred_check
          _
        $region22: #{reverse.1} parent=8 // pred_check_branch
          %35 = sbr.rel (0) target = $region24
        $region23: #{reverse.1} parent=8 // pred_region
          loop: start=0, step=1, limit=1
          $region25: #{reverse.1} parent=23 // loop_pre_header
            _
          $region26: #{reverse.1} parent=23 // loop_header
            %s37 = sphi 0, %s41
            %p38 = scmp.ge.s32.totalorder %s37, 1
            %s42 = sphi %s0, %s0
            %s43 = sphi %s2, %s2
          $region27: #{reverse.1} parent=23 // loop_header_branch
            %40 = sbr.rel (%p38) target = $region31
          $region28: #{reverse.1} parent=23 // loop_body
            %v44 = vld [vmem:[%s42] sm:$0xff]
            %45 = vst [vmem:[%s43] sm:$0xff] %v44
            %v46 = vld [vmem:[%s42 + $0x8] sm:$0xff]
            %47 = vst [vmem:[%s43 + $0x10] sm:$0xff] %v46
            %v48 = vld [vmem:[%s42 + $0x10] sm:$0xff]
            %49 = vst [vmem:[%s43 + $0x20] sm:$0xff] %v48
            %v50 = vld [vmem:[%s42 + $0x18] sm:$0xff]
            %51 = vst [vmem:[%s43 + $0x30] sm:$0xff] %v50
            %v52 = vld [vmem:[%s42 + $0x20] sm:$0xff]
            %53 = vst [vmem:[%s43 + $0x40] sm:$0xff] %v52
            %v54 = vld [vmem:[%s42 + $0x28] sm:$0xff]
            %55 = vst [vmem:[%s43 + $0x50] sm:$0xff] %v54
            %v56 = vld [vmem:[%s42 + $0x30] sm:$0xff]
            %57 = vst [vmem:[%s43 + $0x60] sm:$0xff] %v56
            %v58 = vld [vmem:[%s42 + $0x38] sm:$0xff]
            %59 = vst [vmem:[%s43 + $0x70] sm:$0xff] %v58
          $region29: #{reverse.1} parent=23 // loop_footer
            %s41 = sadd.s32 1, %s37
          $region30: #{reverse.1} parent=23 // loop_footer_branch
            %36 = sbr.rel target = $region26
          $region31: #{reverse.1} parent=23 // loop_exit
            _
        $region24: #{reverse.1} parent=8 // pred_fallthru
          _
        // Predicated region
        $region32: #{reverse.1} parent=8 // pred_check
          _
        $region33: #{reverse.1} parent=8 // pred_check_branch
          %61 = sbr.rel target = $region35
        $region34: #{reverse.1} parent=8 // pred_region
          _
        $region35: #{reverse.1} parent=8 // pred_fallthru
          _
      $region9: #{reverse.1} parent=4 // pred_fallthru
        _
      // Predicated region
      $region10: #{reverse.1} parent=4 // pred_check
        _
      $region11: #{reverse.1} parent=4 // pred_check_branch
        %8 = sbr.rel target = $region13
      $region12: #{reverse.1} parent=4 // pred_region
        loop: start=0, step=1, limit=1
        $region14: #{reverse.1} parent=12 // loop_pre_header
          _
        $region15: #{reverse.1} parent=12 // loop_header
          %s11 = sphi 0, %s15
          %p12 = scmp.ge.s32.totalorder %s11, 1
          %s16 = sphi %s0, %s0
          %s17 = sphi %s2, %s2
        $region16: #{reverse.1} parent=12 // loop_header_branch
          %14 = sbr.rel (%p12) target = $region20
        $region17: #{reverse.1} parent=12 // loop_body
          %v18 = vld [vmem:[%s16] sm:$0xff]
          %19 = vst [vmem:[%s17] sm:$0xff] %v18
          %v20 = vld [vmem:[%s16 + $0x8] sm:$0xff]
          %21 = vst [vmem:[%s17 + $0x10] sm:$0xff] %v20
          %v22 = vld [vmem:[%s16 + $0x10] sm:$0xff]
          %23 = vst [vmem:[%s17 + $0x20] sm:$0xff] %v22
          %v24 = vld [vmem:[%s16 + $0x18] sm:$0xff]
          %25 = vst [vmem:[%s17 + $0x30] sm:$0xff] %v24
          %v26 = vld [vmem:[%s16 + $0x20] sm:$0xff]
          %27 = vst [vmem:[%s17 + $0x40] sm:$0xff] %v26
          %v28 = vld [vmem:[%s16 + $0x28] sm:$0xff]
          %29 = vst [vmem:[%s17 + $0x50] sm:$0xff] %v28
          %v30 = vld [vmem:[%s16 + $0x30] sm:$0xff]
          %31 = vst [vmem:[%s17 + $0x60] sm:$0xff] %v30
          %v32 = vld [vmem:[%s16 + $0x38] sm:$0xff]
          %33 = vst [vmem:[%s17 + $0x70] sm:$0xff] %v32
        $region18: #{reverse.1} parent=12 // loop_footer
          %s15 = sadd.s32 1, %s11
        $region19: #{reverse.1} parent=12 // loop_footer_branch
          %10 = sbr.rel target = $region15
        $region20: #{reverse.1} parent=12 // loop_exit
          _
      $region13: #{reverse.1} parent=4 // pred_fallthru
        _
    $region5: #{reverse.1} parent=1 // pred_fallthru
      _
    %62 = vnop
    %s63 = scalar_lea.vmem [#allocation0], 7
    %v64 = vld [vmem:[%s63] ss:$-1 sm:$0xff]
    %v65 = vrot.slane %v64, 1
    %66 = vst [vmem:[#allocation1] sm:$0xff] %v65
    %s67 = scalar_lea.vmem [#allocation0], 8
    %s68 = scalar_lea.vmem %s67, 7 [#allocation0]
    %v69 = vld [vmem:[%s68] ss:$-1 sm:$0xff]
    %v70 = vrot.slane %v69, 1
    %v71 = vlaneseq
    %v72 = vshrl.u32 %v71, 7
    %vm73 = vcmp.lt.s32.totalorder %v72, 7
    %74 = vst.msk [vmem:[#allocation1] sm:$0xff] %vm73, %v70
    %s75 = scalar_lea.vmem [#allocation1], 8
    %s76 = scalar_lea.vmem [#allocation0], 16
    %s77 = scalar_lea.vmem %s76, 7 [#allocation0]
    %v78 = vld [vmem:[%s77] ss:$-1 sm:$0xff]
    %v79 = vrot.slane %v78, 1
    %80 = vst [vmem:[%s75] sm:$0xff] %v79
    %s81 = scalar_lea.vmem %s76, 8 [#allocation0]
    %s82 = scalar_lea.vmem %s81, 7 [#allocation0]
    %v83 = vld [vmem:[%s82] ss:$-1 sm:$0xff]
    %v84 = vrot.slane %v83, 1
    %v85 = vlaneseq
    %v86 = vshrl.u32 %v85, 7
    %vm87 = vcmp.lt.s32.totalorder %v86, 7
    %88 = vst.msk [vmem:[%s75] sm:$0xff] %vm87, %v84
    %s89 = scalar_lea.vmem [#allocation1], 16
    %s90 = scalar_lea.vmem [#allocation0], 32
    %s91 = scalar_lea.vmem %s90, 7 [#allocation0]
    %v92 = vld [vmem:[%s91] ss:$-1 sm:$0xff]
    %v93 = vrot.slane %v92, 1
    %94 = vst [vmem:[%s89] sm:$0xff] %v93
    %s95 = scalar_lea.vmem %s90, 8 [#allocation0]
    %s96 = scalar_lea.vmem %s95, 7 [#allocation0]
    %v97 = vld [vmem:[%s96] ss:$-1 sm:$0xff]
    %v98 = vrot.slane %v97, 1
    %v99 = vlaneseq
    %v100 = vshrl.u32 %v99, 7
    %vm101 = vcmp.lt.s32.totalorder %v100, 7
    %102 = vst.msk [vmem:[%s89] sm:$0xff] %vm101, %v98
    %s103 = scalar_lea.vmem [#allocation1], 24
    %s104 = scalar_lea.vmem [#allocation0], 48
    %s105 = scalar_lea.vmem %s104, 7 [#allocation0]
    %v106 = vld [vmem:[%s105] ss:$-1 sm:$0xff]
    %v107 = vrot.slane %v106, 1
    %108 = vst [vmem:[%s103] sm:$0xff] %v107
    %s109 = scalar_lea.vmem %s104, 8 [#allocation0]
    %s110 = scalar_lea.vmem %s109, 7 [#allocation0]
    %v111 = vld [vmem:[%s110] ss:$-1 sm:$0xff]
    %v112 = vrot.slane %v111, 1
    %v113 = vlaneseq
    %v114 = vshrl.u32 %v113, 7
    %vm115 = vcmp.lt.s32.totalorder %v114, 7
    %116 = vst.msk [vmem:[%s103] sm:$0xff] %vm115, %v112
    %s117 = scalar_lea.vmem [#allocation1], 32
    %s118 = scalar_lea.vmem [#allocation0], 64
    %s119 = scalar_lea.vmem %s118, 7 [#allocation0]
    %v120 = vld [vmem:[%s119] ss:$-1 sm:$0xff]
    %v121 = vrot.slane %v120, 1
    %122 = vst [vmem:[%s117] sm:$0xff] %v121
    %s123 = scalar_lea.vmem %s118, 8 [#allocation0]
    %s124 = scalar_lea.vmem %s123, 7 [#allocation0]
    %v125 = vld [vmem:[%s124] ss:$-1 sm:$0xff]
    %v126 = vrot.slane %v125, 1
    %v127 = vlaneseq
    %v128 = vshrl.u32 %v127, 7
    %vm129 = vcmp.lt.s32.totalorder %v128, 7
    %130 = vst.msk [vmem:[%s117] sm:$0xff] %vm129, %v126
    %s131 = scalar_lea.vmem [#allocation1], 40
    %s132 = scalar_lea.vmem [#allocation0], 80
    %s133 = scalar_lea.vmem %s132, 7 [#allocation0]
    %v134 = vld [vmem:[%s133] ss:$-1 sm:$0xff]
    %v135 = vrot.slane %v134, 1
    %136 = vst [vmem:[%s131] sm:$0xff] %v135
    %s137 = scalar_lea.vmem %s132, 8 [#allocation0]
    %s138 = scalar_lea.vmem %s137, 7 [#allocation0]
    %v139 = vld [vmem:[%s138] ss:$-1 sm:$0xff]
    %v140 = vrot.slane %v139, 1
    %v141 = vlaneseq
    %v142 = vshrl.u32 %v141, 7
    %vm143 = vcmp.lt.s32.totalorder %v142, 7
    %144 = vst.msk [vmem:[%s131] sm:$0xff] %vm143, %v140
    %s145 = scalar_lea.vmem [#allocation1], 48
    %s146 = scalar_lea.vmem [#allocation0], 96
    %s147 = scalar_lea.vmem %s146, 7 [#allocation0]
    %v148 = vld [vmem:[%s147] ss:$-1 sm:$0xff]
    %v149 = vrot.slane %v148, 1
    %150 = vst [vmem:[%s145] sm:$0xff] %v149
    %s151 = scalar_lea.vmem %s146, 8 [#allocation0]
    %s152 = scalar_lea.vmem %s151, 7 [#allocation0]
    %v153 = vld [vmem:[%s152] ss:$-1 sm:$0xff]
    %v154 = vrot.slane %v153, 1
    %v155 = vlaneseq
    %v156 = vshrl.u32 %v155, 7
    %vm157 = vcmp.lt.s32.totalorder %v156, 7
    %158 = vst.msk [vmem:[%s145] sm:$0xff] %vm157, %v154
    %s159 = scalar_lea.vmem [#allocation1], 56
    %s160 = scalar_lea.vmem [#allocation0], 112
    %s161 = scalar_lea.vmem %s160, 7 [#allocation0]
    %v162 = vld [vmem:[%s161] ss:$-1 sm:$0xff]
    %v163 = vrot.slane %v162, 1
    %164 = vst [vmem:[%s159] sm:$0xff] %v163
    %s165 = scalar_lea.vmem %s160, 8 [#allocation0]
    %s166 = scalar_lea.vmem %s165, 7 [#allocation0]
    %v167 = vld [vmem:[%s166] ss:$-1 sm:$0xff]
    %v168 = vrot.slane %v167, 1
    %v169 = vlaneseq
    %v170 = vshrl.u32 %v169, 7
    %vm171 = vcmp.lt.s32.totalorder %v170, 7
    %172 = vst.msk [vmem:[%s159] sm:$0xff] %vm171, %v168
    // Predicated region
    $region36: #{reverse.1} parent=1 // pred_check
      _
    $region37: #{reverse.1} parent=1 // pred_check_branch
      %174 = sbr.rel (0) target = $region39
    $region38: #{reverse.1} parent=1 // pred_region
      // Predicated region
      $region40: #{reverse.1} parent=38 // pred_check
        _
      $region41: #{reverse.1} parent=38 // pred_check_branch
        %176 = sbr.rel (0) target = $region43
      $region42: #{reverse.1} parent=38 // pred_region
        // Predicated region
        $region55: #{reverse.1} parent=42 // pred_check
          _
        $region56: #{reverse.1} parent=42 // pred_check_branch
          %205 = sbr.rel (0) target = $region58
        $region57: #{reverse.1} parent=42 // pred_region
          loop: start=0, step=1, limit=1
          $region59: #{reverse.1} parent=57 // loop_pre_header
            _
          $region60: #{reverse.1} parent=57 // loop_header
            %s207 = sphi 0, %s211
            %p208 = scmp.ge.s32.totalorder %s207, 1
            %s212 = sphi [#allocation1], [#allocation1]
            %s213 = sphi %s1, %s1
          $region61: #{reverse.1} parent=57 // loop_header_branch
            %210 = sbr.rel (%p208) target = $region65
          $region62: #{reverse.1} parent=57 // loop_body
            %v214 = vld [vmem:[%s212] sm:$0xff]
            %215 = vst [vmem:[%s213] sm:$0xff] %v214
            %v216 = vld [vmem:[%s212 + $0x8] sm:$0xff]
            %217 = vst [vmem:[%s213 + $0x8] sm:$0xff] %v216
            %v218 = vld [vmem:[%s212 + $0x10] sm:$0xff]
            %219 = vst [vmem:[%s213 + $0x10] sm:$0xff] %v218
            %v220 = vld [vmem:[%s212 + $0x18] sm:$0xff]
            %221 = vst [vmem:[%s213 + $0x18] sm:$0xff] %v220
            %v222 = vld [vmem:[%s212 + $0x20] sm:$0xff]
            %223 = vst [vmem:[%s213 + $0x20] sm:$0xff] %v222
            %v224 = vld [vmem:[%s212 + $0x28] sm:$0xff]
            %225 = vst [vmem:[%s213 + $0x28] sm:$0xff] %v224
            %v226 = vld [vmem:[%s212 + $0x30] sm:$0xff]
            %227 = vst [vmem:[%s213 + $0x30] sm:$0xff] %v226
            %v228 = vld [vmem:[%s212 + $0x38] sm:$0xff]
            %229 = vst [vmem:[%s213 + $0x38] sm:$0xff] %v228
          $region63: #{reverse.1} parent=57 // loop_footer
            %s211 = sadd.s32 1, %s207
          $region64: #{reverse.1} parent=57 // loop_footer_branch
            %206 = sbr.rel target = $region60
          $region65: #{reverse.1} parent=57 // loop_exit
            _
        $region58: #{reverse.1} parent=42 // pred_fallthru
          _
        // Predicated region
        $region66: #{reverse.1} parent=42 // pred_check
          _
        $region67: #{reverse.1} parent=42 // pred_check_branch
          %231 = sbr.rel target = $region69
        $region68: #{reverse.1} parent=42 // pred_region
          _
        $region69: #{reverse.1} parent=42 // pred_fallthru
          _
      $region43: #{reverse.1} parent=38 // pred_fallthru
        _
      // Predicated region
      $region44: #{reverse.1} parent=38 // pred_check
        _
      $region45: #{reverse.1} parent=38 // pred_check_branch
        %178 = sbr.rel target = $region47
      $region46: #{reverse.1} parent=38 // pred_region
        loop: start=0, step=1, limit=1
        $region48: #{reverse.1} parent=46 // loop_pre_header
          _
        $region49: #{reverse.1} parent=46 // loop_header
          %s181 = sphi 0, %s185
          %p182 = scmp.ge.s32.totalorder %s181, 1
          %s186 = sphi [#allocation1], [#allocation1]
          %s187 = sphi %s1, %s1
        $region50: #{reverse.1} parent=46 // loop_header_branch
          %184 = sbr.rel (%p182) target = $region54
        $region51: #{reverse.1} parent=46 // loop_body
          %v188 = vld [vmem:[%s186] sm:$0xff]
          %189 = vst [vmem:[%s187] sm:$0xff] %v188
          %v190 = vld [vmem:[%s186 + $0x8] sm:$0xff]
          %191 = vst [vmem:[%s187 + $0x8] sm:$0xff] %v190
          %v192 = vld [vmem:[%s186 + $0x10] sm:$0xff]
          %193 = vst [vmem:[%s187 + $0x10] sm:$0xff] %v192
          %v194 = vld [vmem:[%s186 + $0x18] sm:$0xff]
          %195 = vst [vmem:[%s187 + $0x18] sm:$0xff] %v194
          %v196 = vld [vmem:[%s186 + $0x20] sm:$0xff]
          %197 = vst [vmem:[%s187 + $0x20] sm:$0xff] %v196
          %v198 = vld [vmem:[%s186 + $0x28] sm:$0xff]
          %199 = vst [vmem:[%s187 + $0x28] sm:$0xff] %v198
          %v200 = vld [vmem:[%s186 + $0x30] sm:$0xff]
          %201 = vst [vmem:[%s187 + $0x30] sm:$0xff] %v200
          %v202 = vld [vmem:[%s186 + $0x38] sm:$0xff]
          %203 = vst [vmem:[%s187 + $0x38] sm:$0xff] %v202
        $region52: #{reverse.1} parent=46 // loop_footer
          %s185 = sadd.s32 1, %s181
        $region53: #{reverse.1} parent=46 // loop_footer_branch
          %180 = sbr.rel target = $region49
        $region54: #{reverse.1} parent=46 // loop_exit
          _
      $region47: #{reverse.1} parent=38 // pred_fallthru
        _
    $region39: #{reverse.1} parent=1 // pred_fallthru
      _
    %232 = vnop

</llo_original>
